<compile_context>
chip_gen: v5e
topology: v5e:2x2
jax: 0.10.0
libtpu: 0.0.40
codegen_flags: <defaults>
</compile_context>

<pallas_src>
import functools

import jax
import jax.numpy as jnp
import numpy as np
from jax.experimental import pallas as pl
from jax.experimental.pallas import tpu as pltpu

NFILTERS = 64
NFC = 64
KSIZE = 4
STRIDE = 4
EGO_DIM = 4
BN_EPS = 1e-5
LANE = 128

# Row offsets of each block inside the packed weight slab (all multiples of 8).
_W1_OFF = 0          # conv1 (BN1 folded): rows 0:4  cols 0:64
_W2_OFF = 128        # conv2 (BN2 folded): rows 0:64 cols 0:64
_FW1_OFF = 256       # fc1: rows 0:64 = pooled part, rows 64:68 = ego part
_FW2_OFF = 384       # fc2: rows 0:64 cols 0:64
_FW3_OFF = 512       # fc3: rows 0:64 cols 0:outputs
_BIAS_OFF = 640      # biases: row0=b1 row1=b2 row2=fb1 row3=fb2 row4=fb3
_SLAB_ROWS = 648


def _round_up(x, m):
    return -(-x // m) * m


def cnn_kernel(T, bm, xp_ref, ego_ref, w_ref, out_ref):
    # (T, bm, 128) -> (T*bm, 128): layout no-op (bm is a multiple of 8).
    x = xp_ref[...].reshape(T * bm, LANE)

    W1 = w_ref[_W1_OFF:_W1_OFF + LANE, :]
    W2 = w_ref[_W2_OFF:_W2_OFF + LANE, :]
    FW1 = w_ref[_FW1_OFF:_FW1_OFF + LANE, :]
    FW2 = w_ref[_FW2_OFF:_FW2_OFF + LANE, :]
    FW3 = w_ref[_FW3_OFF:_FW3_OFF + LANE, :]
    bias = w_ref[_BIAS_OFF:_BIAS_OFF + 8, :]
    b1, b2 = bias[0:1, :], bias[1:2, :]
    fb1, fb2, fb3 = bias[2:3, :], bias[3:4, :], bias[4:5, :]

    # conv1 (k=4, stride=4) + folded bn1 + relu  (cols 64:128 stay exactly 0)
    h1 = jnp.maximum(jnp.dot(x, W1, preferred_element_type=jnp.float32) + b1, 0.0)
    # conv2 (k=1) + folded bn2 + relu
    h2 = jnp.maximum(jnp.dot(h1, W2, preferred_element_type=jnp.float32) + b2, 0.0)

    # MaxPool1d(10): rows are ordered (t, b); each bm-row group is sublane aligned.
    pooled = h2[0:bm, :]
    for t in range(1, T):
        pooled = jnp.maximum(pooled, h2[t * bm:(t + 1) * bm, :])

    # concat(ego, pooled): ego arrives pre-placed in cols 64:68, pooled cols 64:128
    # are exactly zero, so the concat is a single VPU add.
    enc = pooled + ego_ref[...]

    # fc1 (fused ego+pooled contraction), fc2, fc3.
    f1 = jnp.maximum(jnp.dot(enc, FW1, preferred_element_type=jnp.float32) + fb1, 0.0)
    f2 = jnp.maximum(jnp.dot(f1, FW2, preferred_element_type=jnp.float32) + fb2, 0.0)
    out_ref[...] = jnp.dot(f2, FW3, preferred_element_type=jnp.float32) + fb3


def make_params(key, inputs_dim=44, outputs=5):
    """Deterministic synthetic parameters matching the PyTorch module's shapes."""
    ks = jax.random.split(key, 18)

    def u(k, shape, scale=0.1):
        return jax.random.uniform(k, shape, jnp.float32, -scale, scale)

    return {
        "conv1_w": u(ks[0], (NFILTERS, 1, KSIZE)),
        "conv1_b": u(ks[1], (NFILTERS,)),
        "bn1_gamma": 1.0 + u(ks[2], (NFILTERS,)),
        "bn1_beta": u(ks[3], (NFILTERS,)),
        "bn1_mean": u(ks[4], (NFILTERS,)),
        "bn1_var": 1.0 + jnp.abs(u(ks[5], (NFILTERS,))),
        "conv2_w": u(ks[6], (NFILTERS, NFILTERS, 1)),
        "conv2_b": u(ks[7], (NFILTERS,)),
        "bn2_gamma": 1.0 + u(ks[8], (NFILTERS,)),
        "bn2_beta": u(ks[9], (NFILTERS,)),
        "bn2_mean": u(ks[10], (NFILTERS,)),
        "bn2_var": 1.0 + jnp.abs(u(ks[11], (NFILTERS,))),
        "fc1_w": u(ks[12], (NFC, EGO_DIM + NFILTERS)),
        "fc1_b": u(ks[13], (NFC,)),
        "fc2_w": u(ks[14], (NFC, NFC)),
        "fc2_b": u(ks[15], (NFC,)),
        "fc3_w": u(ks[16], (outputs, NFC)),
        "fc3_b": u(ks[17], (outputs,)),
    }


def build_weight_slab(p, outputs):
    """Fold eval-mode BN into the convs and pack all params into one (648,128) slab."""
    s1 = p["bn1_gamma"] / jnp.sqrt(p["bn1_var"] + BN_EPS)
    w1 = (p["conv1_w"][:, 0, :] * s1[:, None]).T                     # (4, 64)
    b1 = s1 * (p["conv1_b"] - p["bn1_mean"]) + p["bn1_beta"]         # (64,)

    s2 = p["bn2_gamma"] / jnp.sqrt(p["bn2_var"] + BN_EPS)
    w2 = (p["conv2_w"][:, :, 0] * s2[:, None]).T                     # (64, 64)
    b2 = s2 * (p["conv2_b"] - p["bn2_mean"]) + p["bn2_beta"]         # (64,)

    # fc1 weight: rows 0:64 act on pooled features, rows 64:68 act on ego.
    fw1 = jnp.concatenate([p["fc1_w"][:, EGO_DIM:].T,
                           p["fc1_w"][:, :EGO_DIM].T], axis=0)       # (68, 64)
    fw2 = p["fc2_w"].T                                               # (64, 64)
    fw3 = p["fc3_w"].T                                               # (64, outputs)

    def blk(w):
        r, c = w.shape
        return jnp.pad(w, ((0, LANE - r), (0, LANE - c)))

    bias = jnp.zeros((8, LANE), jnp.float32)
    bias = bias.at[0, :NFILTERS].set(b1)
    bias = bias.at[1, :NFILTERS].set(b2)
    bias = bias.at[2, :NFC].set(p["fc1_b"])
    bias = bias.at[3, :NFC].set(p["fc2_b"])
    bias = bias.at[4, :outputs].set(p["fc3_b"])

    return jnp.concatenate(
        [blk(w1), blk(w2), blk(fw1), blk(fw2), blk(fw3), bias], axis=0)  # (648,128)


def cnn_forward(inputs, params, outputs=5):
    B = inputs.shape[0]
    L = inputs.shape[1] - EGO_DIM            # 40
    T = L // STRIDE                          # 10 conv-output timesteps

    # Batch tiling: pad to a multiple of 8; tile at most 256 rows per grid step.
    B_pad8 = _round_up(B, 8)
    bm = 256 if B_pad8 >= 256 else B_pad8
    B_pad = _round_up(B_pad8, bm)
    grid = (B_pad // bm,)

    ego = inputs[:, :EGO_DIM]                                        # (B, 4)
    x = inputs[:, EGO_DIM:]                                          # (B, 40)
    patches = x.reshape(B, T, KSIZE).transpose(1, 0, 2)              # (T, B, 4)

    # Lane-dense, zero-padded operands (extra rows/cols are zeros -> harmless,
    # padded batch rows are sliced off at the end).
    xp = jnp.zeros((T, B_pad, LANE), jnp.float32).at[:, :B, :KSIZE].set(patches)
    ego128 = jnp.zeros((B_pad, LANE), jnp.float32).at[
        :B, NFILTERS:NFILTERS + EGO_DIM].set(ego)

    slab = build_weight_slab(params, outputs)

    flops = 2 * (T * B_pad * LANE * LANE * 2 + B_pad * LANE * LANE * 3)
    bytes_accessed = 4 * (xp.size + ego128.size + slab.size + B_pad * LANE)

    kernel = functools.partial(cnn_kernel, T, bm)
    out = pl.pallas_call(
        kernel,
        out_shape=jax.ShapeDtypeStruct((B_pad, LANE), jnp.float32),
        grid=grid,
        in_specs=[
            pl.BlockSpec((T, bm, LANE), lambda i: (0, i, 0)),        # patches
            pl.BlockSpec((bm, LANE), lambda i: (i, 0)),              # ego (cols 64:68)
            pl.BlockSpec((_SLAB_ROWS, LANE), lambda i: (0, 0)),      # weight slab
        ],
        out_specs=pl.BlockSpec((bm, LANE), lambda i: (i, 0)),
        compiler_params=pltpu.CompilerParams(dimension_semantics=("parallel",)),
        cost_estimate=pl.CostEstimate(flops=flops, transcendentals=0,
                                      bytes_accessed=bytes_accessed),
    )(xp, ego128, slab)
    return out[:B, :outputs]


def reference_forward(inputs, p, outputs=5):
    """Pure-JAX mirror of the PyTorch forward (eval-mode BN)."""
    B = inputs.shape[0]
    ego = inputs[:, :EGO_DIM]
    x = inputs[:, EGO_DIM:]                                          # (B, 40)
    T = x.shape[1] // STRIDE

    patches = x.reshape(B, T, KSIZE)                                 # (B, 10, 4)
    c1 = jnp.einsum("btk,fk->bft", patches, p["conv1_w"][:, 0, :]) \
        + p["conv1_b"][None, :, None]
    h = (c1 - p["bn1_mean"][None, :, None]) / jnp.sqrt(p["bn1_var"][None, :, None] + BN_EPS)
    h = jax.nn.relu(h * p["bn1_gamma"][None, :, None] + p["bn1_beta"][None, :, None])

    c2 = jnp.einsum("bct,fc->bft", h, p["conv2_w"][:, :, 0]) \
        + p["conv2_b"][None, :, None]
    h = (c2 - p["bn2_mean"][None, :, None]) / jnp.sqrt(p["bn2_var"][None, :, None] + BN_EPS)
    h = jax.nn.relu(h * p["bn2_gamma"][None, :, None] + p["bn2_beta"][None, :, None])

    pooled = jnp.max(h, axis=2)                                      # (B, 64)
    enc = jnp.concatenate([ego, pooled], axis=1)                     # (B, 68)
    f = jax.nn.relu(enc @ p["fc1_w"].T + p["fc1_b"])
    f = jax.nn.relu(f @ p["fc2_w"].T + p["fc2_b"])
    return f @ p["fc3_w"].T + p["fc3_b"]


if __name__ == "__main__":
    B, INPUTS, OUTPUTS = 4, 44, 5
    key = jax.random.PRNGKey(0)
    k_in, k_par = jax.random.split(key)

    inputs = jax.random.uniform(k_in, (B, INPUTS), jnp.float32, -1.0, 1.0)
    params = make_params(k_par, inputs_dim=INPUTS, outputs=OUTPUTS)

    out = jax.block_until_ready(cnn_forward(inputs, params, outputs=OUTPUTS))
    ref = jax.block_until_ready(reference_forward(inputs, params, outputs=OUTPUTS))

    assert out.shape == (B, OUTPUTS), out.shape
    np.testing.assert_allclose(np.asarray(out), np.asarray(ref), rtol=1e-4, atol=1e-4)
    print("KERNEL_OK")
</pallas_src>

<mosaic_0001>
module attributes {stable_mosaic.version = 11 : i64} {
  func.func @cnn_kernel(%arg0: i32, %arg1: memref<10x8x128xf32, #tpu.memory_space<vmem>>, %arg2: memref<8x128xf32, #tpu.memory_space<vmem>>, %arg3: memref<648x128xf32, #tpu.memory_space<vmem>>, %arg4: memref<8x128xf32, #tpu.memory_space<vmem>>) attributes {dimension_semantics = [#tpu.dimension_semantics<parallel>], iteration_bounds = array<i64: 1>, scalar_prefetch = 0 : i64, scratch_operands = 0 : i64, tpu.core_type = #tpu.core_type<tc>, window_params = [{transform_indices = @transform_0, window_bounds = array<i64: 10, 8, 128>}, {transform_indices = @transform_1, window_bounds = array<i64: 8, 128>}, {pipeline_mode = #tpu.pipeline_mode<synchronous>, transform_indices = @transform_2, window_bounds = array<i64: 648, 128>}, {transform_indices = @transform_3, window_bounds = array<i64: 8, 128>}]} {
    %c0 = arith.constant 0 : index
    %c0_0 = arith.constant 0 : index
    %c0_1 = arith.constant 0 : index
    %0 = vector.load %arg1[%c0, %c0_0, %c0_1] : memref<10x8x128xf32, #tpu.memory_space<vmem>>, vector<10x8x128xf32>
    %1 = vector.shape_cast %0 : vector<10x8x128xf32> to vector<80x128xf32>
    %c0_2 = arith.constant 0 : index
    %c0_3 = arith.constant 0 : index
    %2 = vector.load %arg3[%c0_2, %c0_3] : memref<648x128xf32, #tpu.memory_space<vmem>>, vector<128x128xf32>
    %c128 = arith.constant 128 : index
    %c0_4 = arith.constant 0 : index
    %3 = vector.load %arg3[%c128, %c0_4] : memref<648x128xf32, #tpu.memory_space<vmem>>, vector<128x128xf32>
    %c256 = arith.constant 256 : index
    %c0_5 = arith.constant 0 : index
    %4 = vector.load %arg3[%c256, %c0_5] : memref<648x128xf32, #tpu.memory_space<vmem>>, vector<128x128xf32>
    %c384 = arith.constant 384 : index
    %c0_6 = arith.constant 0 : index
    %5 = vector.load %arg3[%c384, %c0_6] : memref<648x128xf32, #tpu.memory_space<vmem>>, vector<128x128xf32>
    %c512 = arith.constant 512 : index
    %c0_7 = arith.constant 0 : index
    %6 = vector.load %arg3[%c512, %c0_7] : memref<648x128xf32, #tpu.memory_space<vmem>>, vector<128x128xf32>
    %c640 = arith.constant 640 : index
    %c0_8 = arith.constant 0 : index
    %7 = vector.load %arg3[%c640, %c0_8] : memref<648x128xf32, #tpu.memory_space<vmem>>, vector<8x128xf32>
    %8 = vector.extract_strided_slice %7 {offsets = [0, 0], sizes = [1, 128], strides = [1, 1]} : vector<8x128xf32> to vector<1x128xf32>
    %9 = vector.extract_strided_slice %7 {offsets = [1, 0], sizes = [1, 128], strides = [1, 1]} : vector<8x128xf32> to vector<1x128xf32>
    %10 = vector.extract_strided_slice %7 {offsets = [2, 0], sizes = [1, 128], strides = [1, 1]} : vector<8x128xf32> to vector<1x128xf32>
    %11 = vector.extract_strided_slice %7 {offsets = [3, 0], sizes = [1, 128], strides = [1, 1]} : vector<8x128xf32> to vector<1x128xf32>
    %12 = vector.extract_strided_slice %7 {offsets = [4, 0], sizes = [1, 128], strides = [1, 1]} : vector<8x128xf32> to vector<1x128xf32>
    %cst = arith.constant dense<0.000000e+00> : vector<80x128xf32>
    %13 = tpu.matmul %1, %2, %cst {dimension_numbers = #tpu.dot_dimension_numbers<[1], [0], [0], [1], [0, 0, 1, 1], [], []>} : vector<80x128xf32>, vector<128x128xf32>, vector<80x128xf32> -> vector<80x128xf32>
    %14 = vector.broadcast %8 : vector<1x128xf32> to vector<80x128xf32>
    %15 = arith.addf %13, %14 : vector<80x128xf32>
    %cst_9 = arith.constant 0.000000e+00 : f32
    %16 = vector.broadcast %cst_9 : f32 to vector<80x128xf32>
    %17 = arith.maximumf %15, %16 : vector<80x128xf32>
    %cst_10 = arith.constant dense<0.000000e+00> : vector<80x128xf32>
    %18 = tpu.matmul %17, %3, %cst_10 {dimension_numbers = #tpu.dot_dimension_numbers<[1], [0], [0], [1], [0, 0, 1, 1], [], []>} : vector<80x128xf32>, vector<128x128xf32>, vector<80x128xf32> -> vector<80x128xf32>
    %19 = vector.broadcast %9 : vector<1x128xf32> to vector<80x128xf32>
    %20 = arith.addf %18, %19 : vector<80x128xf32>
    %cst_11 = arith.constant 0.000000e+00 : f32
    %21 = vector.broadcast %cst_11 : f32 to vector<80x128xf32>
    %22 = arith.maximumf %20, %21 : vector<80x128xf32>
    %23 = vector.extract_strided_slice %22 {offsets = [0, 0], sizes = [8, 128], strides = [1, 1]} : vector<80x128xf32> to vector<8x128xf32>
    %24 = vector.extract_strided_slice %22 {offsets = [8, 0], sizes = [8, 128], strides = [1, 1]} : vector<80x128xf32> to vector<8x128xf32>
    %25 = arith.maximumf %23, %24 : vector<8x128xf32>
    %26 = vector.extract_strided_slice %22 {offsets = [16, 0], sizes = [8, 128], strides = [1, 1]} : vector<80x128xf32> to vector<8x128xf32>
    %27 = arith.maximumf %25, %26 : vector<8x128xf32>
    %28 = vector.extract_strided_slice %22 {offsets = [24, 0], sizes = [8, 128], strides = [1, 1]} : vector<80x128xf32> to vector<8x128xf32>
    %29 = arith.maximumf %27, %28 : vector<8x128xf32>
    %30 = vector.extract_strided_slice %22 {offsets = [32, 0], sizes = [8, 128], strides = [1, 1]} : vector<80x128xf32> to vector<8x128xf32>
    %31 = arith.maximumf %29, %30 : vector<8x128xf32>
    %32 = vector.extract_strided_slice %22 {offsets = [40, 0], sizes = [8, 128], strides = [1, 1]} : vector<80x128xf32> to vector<8x128xf32>
    %33 = arith.maximumf %31, %32 : vector<8x128xf32>
    %34 = vector.extract_strided_slice %22 {offsets = [48, 0], sizes = [8, 128], strides = [1, 1]} : vector<80x128xf32> to vector<8x128xf32>
    %35 = arith.maximumf %33, %34 : vector<8x128xf32>
    %36 = vector.extract_strided_slice %22 {offsets = [56, 0], sizes = [8, 128], strides = [1, 1]} : vector<80x128xf32> to vector<8x128xf32>
    %37 = arith.maximumf %35, %36 : vector<8x128xf32>
    %38 = vector.extract_strided_slice %22 {offsets = [64, 0], sizes = [8, 128], strides = [1, 1]} : vector<80x128xf32> to vector<8x128xf32>
    %39 = arith.maximumf %37, %38 : vector<8x128xf32>
    %40 = vector.extract_strided_slice %22 {offsets = [72, 0], sizes = [8, 128], strides = [1, 1]} : vector<80x128xf32> to vector<8x128xf32>
    %41 = arith.maximumf %39, %40 : vector<8x128xf32>
    %c0_12 = arith.constant 0 : index
    %c0_13 = arith.constant 0 : index
    %42 = vector.load %arg2[%c0_12, %c0_13] : memref<8x128xf32, #tpu.memory_space<vmem>>, vector<8x128xf32>
    %43 = arith.addf %41, %42 : vector<8x128xf32>
    %cst_14 = arith.constant dense<0.000000e+00> : vector<8x128xf32>
    %44 = tpu.matmul %43, %4, %cst_14 {dimension_numbers = #tpu.dot_dimension_numbers<[1], [0], [0], [1], [0, 0, 1, 1], [], []>} : vector<8x128xf32>, vector<128x128xf32>, vector<8x128xf32> -> vector<8x128xf32>
    %45 = vector.broadcast %10 : vector<1x128xf32> to vector<8x128xf32>
    %46 = arith.addf %44, %45 : vector<8x128xf32>
    %cst_15 = arith.constant 0.000000e+00 : f32
    %47 = vector.broadcast %cst_15 : f32 to vector<8x128xf32>
    %48 = arith.maximumf %46, %47 : vector<8x128xf32>
    %cst_16 = arith.constant dense<0.000000e+00> : vector<8x128xf32>
    %49 = tpu.matmul %48, %5, %cst_16 {dimension_numbers = #tpu.dot_dimension_numbers<[1], [0], [0], [1], [0, 0, 1, 1], [], []>} : vector<8x128xf32>, vector<128x128xf32>, vector<8x128xf32> -> vector<8x128xf32>
    %50 = vector.broadcast %11 : vector<1x128xf32> to vector<8x128xf32>
    %51 = arith.addf %49, %50 : vector<8x128xf32>
    %cst_17 = arith.constant 0.000000e+00 : f32
    %52 = vector.broadcast %cst_17 : f32 to vector<8x128xf32>
    %53 = arith.maximumf %51, %52 : vector<8x128xf32>
    %cst_18 = arith.constant dense<0.000000e+00> : vector<8x128xf32>
    %54 = tpu.matmul %53, %6, %cst_18 {dimension_numbers = #tpu.dot_dimension_numbers<[1], [0], [0], [1], [0, 0, 1, 1], [], []>} : vector<8x128xf32>, vector<128x128xf32>, vector<8x128xf32> -> vector<8x128xf32>
    %55 = vector.broadcast %12 : vector<1x128xf32> to vector<8x128xf32>
    %56 = arith.addf %54, %55 : vector<8x128xf32>
    %c0_19 = arith.constant 0 : index
    %c0_20 = arith.constant 0 : index
    %57 = vector.load %arg4[%c0_19, %c0_20] : memref<8x128xf32, #tpu.memory_space<vmem>>, vector<8x128xf32>
    tpu.vector_store %arg4[%c0_19, %c0_20], %56 {strides = array<i32>} : memref<8x128xf32, #tpu.memory_space<vmem>>, vector<8x128xf32>,
    return
  }
  func.func @transform_0(%arg0: i32) -> (i32, i32, i32) {
    %c0_i32 = arith.constant 0 : i32
    %c0_i32_0 = arith.constant 0 : i32
    %c0_i32_1 = arith.constant 0 : i32
    return %c0_i32, %arg0, %c0_i32_0 : i32, i32, i32
  }
  func.func @transform_1(%arg0: i32) -> (i32, i32) {
    %c0_i32 = arith.constant 0 : i32
    %c0_i32_0 = arith.constant 0 : i32
    return %arg0, %c0_i32 : i32, i32
  }
  func.func @transform_2(%arg0: i32) -> (i32, i32) {
    %c0_i32 = arith.constant 0 : i32
    %c0_i32_0 = arith.constant 0 : i32
    %c0_i32_1 = arith.constant 0 : i32
    return %c0_i32, %c0_i32_0 : i32, i32
  }
  func.func @transform_3(%arg0: i32) -> (i32, i32) {
    %c0_i32 = arith.constant 0 : i32
    %c0_i32_0 = arith.constant 0 : i32
    return %arg0, %c0_i32 : i32, i32
  }
}

</mosaic_0001>

<llo_original>
// kernel: tpu_custom_call.1
$region0: #{tpu_custom_call.1}
  #allocation0 [shape = 'u32[]', space=smem, size = 0x4, offset = 0x4, fixed_abs, tag = 'smem constant byte address 0x4 - core index']
  #allocation1 [shape = 'u32[72,128]{1,0:T(1,128)}', space=vmem, size = 0x9000, scoped, tag = 'internal scratch']
  %s0 = inlined_call_operand.hbm [shape: f32[10,8,128], index: 0, kind: input, shape index: {}]
  %s1 = inlined_call_operand.hbm [shape: f32[8,128], index: 1, kind: input, shape index: {}]
  %s2 = inlined_call_operand.hbm [shape: f32[648,128], index: 2, kind: input, shape index: {}]
  %s3 = inlined_call_operand.hbm [shape: f32[8,128], index: 3, kind: output, shape index: {}]
  %s4 = sld [smem:[#allocation0]]
  $region34: #{tpu_custom_call.1} parent=0
    _
  %s6 = ssub.s32 1, %s4
  %s7 = scalar_select 0, %s6, %s4
  $region1: #{tpu_custom_call.1} parent=0
    #allocation2 [shape = 'u8[40960]{0}', space=vmem, size = 0xa000, scoped, tag = 'input window, operand 0, single buffered']
    #allocation3 [shape = 's32[1]{0}', space=sflag, size = 0x4, scoped, tag = 'scoped memory for tpu_custom_call.1']
    #allocation4 [shape = 's32[1]{0}', space=sflag, size = 0x4, scoped, tag = 'scoped memory for tpu_custom_call.1']
    #allocation5 [shape = 'u8[4096]{0}', space=vmem, size = 0x1000, scoped, tag = 'input window, operand 1, single buffered']
    #allocation6 [shape = 's32[1]{0}', space=sflag, size = 0x4, scoped, tag = 'scoped memory for tpu_custom_call.1']
    #allocation7 [shape = 'u8[331776]{0}', space=vmem, size = 0x51000, scoped, tag = 'input window, operand 2, single buffered']
    #allocation8 [shape = 'u8[4096]{0}', space=vmem, size = 0x1000, scoped, tag = 'output window, operand 0, single buffered']
    %8 = vsyncpa [#allocation3], 0
    %9 = vsyncpa [#allocation6], 0
    %10 = vsyncpa [#allocation4], 0
    // Predicated region
    $region2: #{tpu_custom_call.1} parent=1 // pred_check
      _
    $region3: #{tpu_custom_call.1} parent=1 // pred_check_branch
      %12 = sbr.rel (0) target = $region5
    $region4: #{tpu_custom_call.1} parent=1 // pred_region
      %14 = vsyncadd [#allocation3], 0
      %s15 = sshll.u32 %s0, 4
      %s16 = int_to_ptr.hbm [resolvable:$true] %s15
      %s17 = sshll.u32 [#allocation2], 4
      %s18 = int_to_ptr.vmem [resolvable:$true] %s17
      %23 = dma.hbm_to_vmem [thread:$0]  %s16, 1280, %s18, [#allocation3], 128, 128, 8
    $region5: #{tpu_custom_call.1} parent=1 // pred_fallthru
      _
    // Predicated region
    $region6: #{tpu_custom_call.1} parent=1 // pred_check
      _
    $region7: #{tpu_custom_call.1} parent=1 // pred_check_branch
      %25 = sbr.rel (0) target = $region9
    $region8: #{tpu_custom_call.1} parent=1 // pred_region
      %27 = vsyncadd [#allocation6], 0
      %s29 = sshll.u32 %s1, 4
      %s30 = int_to_ptr.hbm [resolvable:$true] %s29
      %s31 = sshll.u32 [#allocation5], 4
      %s32 = int_to_ptr.vmem [resolvable:$true] %s31
      %34 = dma.hbm_to_vmem [thread:$0]  %s30, 128, %s32, [#allocation6]
    $region9: #{tpu_custom_call.1} parent=1 // pred_fallthru
      _
    // Predicated region
    $region10: #{tpu_custom_call.1} parent=1 // pred_check
      _
    $region11: #{tpu_custom_call.1} parent=1 // pred_check_branch
      %36 = sbr.rel (0) target = $region13
    $region12: #{tpu_custom_call.1} parent=1 // pred_region
      %38 = vsyncadd [#allocation6], 0
      %s39 = sshll.u32 %s2, 4
      %s40 = int_to_ptr.hbm [resolvable:$true] %s39
      %s41 = sshll.u32 [#allocation7], 4
      %s42 = int_to_ptr.vmem [resolvable:$true] %s41
      %47 = dma.hbm_to_vmem [thread:$0]  %s40, 10368, %s42, [#allocation6], 128, 128, 8
    $region13: #{tpu_custom_call.1} parent=1 // pred_fallthru
      _
    // Predicated region
    $region14: #{tpu_custom_call.1} parent=1 // pred_check
      _
    $region15: #{tpu_custom_call.1} parent=1 // pred_check_branch
      %49 = sbr.rel (0) target = $region17
    $region16: #{tpu_custom_call.1} parent=1 // pred_region
      %51 = dma.done [#allocation3], 1280
    $region17: #{tpu_custom_call.1} parent=1 // pred_fallthru
      _
    // Predicated region
    $region18: #{tpu_custom_call.1} parent=1 // pred_check
      _
    $region19: #{tpu_custom_call.1} parent=1 // pred_check_branch
      %53 = sbr.rel (0) target = $region21
    $region20: #{tpu_custom_call.1} parent=1 // pred_region
      %55 = dma.done [#allocation6], 128
    $region21: #{tpu_custom_call.1} parent=1 // pred_fallthru
      _
    // Predicated region
    $region22: #{tpu_custom_call.1} parent=1 // pred_check
      _
    $region23: #{tpu_custom_call.1} parent=1 // pred_check_branch
      %57 = sbr.rel (0) target = $region25
    $region24: #{tpu_custom_call.1} parent=1 // pred_region
      %59 = dma.done [#allocation6], 10368
    $region25: #{tpu_custom_call.1} parent=1 // pred_fallthru
      _
    %v60 = vld [vmem:[#allocation2] sm:$0xff]
    %v61 = vld [vmem:[#allocation2 + $0x8] sm:$0xff]
    %v62 = vld [vmem:[#allocation2 + $0x10] sm:$0xff]
    %v63 = vld [vmem:[#allocation2 + $0x18] sm:$0xff]
    %v64 = vld [vmem:[#allocation2 + $0x20] sm:$0xff]
    %v65 = vld [vmem:[#allocation2 + $0x28] sm:$0xff]
    %v66 = vld [vmem:[#allocation2 + $0x30] sm:$0xff]
    %v67 = vld [vmem:[#allocation2 + $0x38] sm:$0xff]
    %v68 = vld [vmem:[#allocation2 + $0x40] sm:$0xff]
    %v69 = vld [vmem:[#allocation2 + $0x48] sm:$0xff]
    %v70 = vld [vmem:[#allocation7] sm:$0xff]
    %v71 = vld [vmem:[#allocation7 + $0x8] sm:$0xff]
    %v72 = vld [vmem:[#allocation7 + $0x10] sm:$0xff]
    %v73 = vld [vmem:[#allocation7 + $0x18] sm:$0xff]
    %v74 = vld [vmem:[#allocation7 + $0x20] sm:$0xff]
    %v75 = vld [vmem:[#allocation7 + $0x28] sm:$0xff]
    %v76 = vld [vmem:[#allocation7 + $0x30] sm:$0xff]
    %v77 = vld [vmem:[#allocation7 + $0x38] sm:$0xff]
    %v78 = vld [vmem:[#allocation7 + $0x40] sm:$0xff]
    %v79 = vld [vmem:[#allocation7 + $0x48] sm:$0xff]
    %v80 = vld [vmem:[#allocation7 + $0x50] sm:$0xff]
    %v81 = vld [vmem:[#allocation7 + $0x58] sm:$0xff]
    %v82 = vld [vmem:[#allocation7 + $0x60] sm:$0xff]
    %v83 = vld [vmem:[#allocation7 + $0x68] sm:$0xff]
    %v84 = vld [vmem:[#allocation7 + $0x70] sm:$0xff]
    %v85 = vld [vmem:[#allocation7 + $0x78] sm:$0xff]
    %v86 = vld [vmem:[#allocation7 + $0x80] sm:$0xff]
    %v87 = vld [vmem:[#allocation7 + $0x88] sm:$0xff]
    %v88 = vld [vmem:[#allocation7 + $0x90] sm:$0xff]
    %v89 = vld [vmem:[#allocation7 + $0x98] sm:$0xff]
    %v90 = vld [vmem:[#allocation7 + $0xa0] sm:$0xff]
    %v91 = vld [vmem:[#allocation7 + $0xa8] sm:$0xff]
    %v92 = vld [vmem:[#allocation7 + $0xb0] sm:$0xff]
    %v93 = vld [vmem:[#allocation7 + $0xb8] sm:$0xff]
    %v94 = vld [vmem:[#allocation7 + $0xc0] sm:$0xff]
    %v95 = vld [vmem:[#allocation7 + $0xc8] sm:$0xff]
    %v96 = vld [vmem:[#allocation7 + $0xd0] sm:$0xff]
    %v97 = vld [vmem:[#allocation7 + $0xd8] sm:$0xff]
    %v98 = vld [vmem:[#allocation7 + $0xe0] sm:$0xff]
    %v99 = vld [vmem:[#allocation7 + $0xe8] sm:$0xff]
    %v100 = vld [vmem:[#allocation7 + $0xf0] sm:$0xff]
    %v101 = vld [vmem:[#allocation7 + $0xf8] sm:$0xff]
    %v102 = vld [vmem:[#allocation7 + $0x100] sm:$0xff]
    %v103 = vld [vmem:[#allocation7 + $0x108] sm:$0xff]
    %v104 = vld [vmem:[#allocation7 + $0x110] sm:$0xff]
    %v105 = vld [vmem:[#allocation7 + $0x118] sm:$0xff]
    %v106 = vld [vmem:[#allocation7 + $0x120] sm:$0xff]
    %v107 = vld [vmem:[#allocation7 + $0x128] sm:$0xff]
    %v108 = vld [vmem:[#allocation7 + $0x130] sm:$0xff]
    %v109 = vld [vmem:[#allocation7 + $0x138] sm:$0xff]
    %v110 = vld [vmem:[#allocation7 + $0x140] sm:$0xff]
    %v111 = vld [vmem:[#allocation7 + $0x148] sm:$0xff]
    %v112 = vld [vmem:[#allocation7 + $0x150] sm:$0xff]
    %v113 = vld [vmem:[#allocation7 + $0x158] sm:$0xff]
    %v114 = vld [vmem:[#allocation7 + $0x160] sm:$0xff]
    %v115 = vld [vmem:[#allocation7 + $0x168] sm:$0xff]
    %v116 = vld [vmem:[#allocation7 + $0x170] sm:$0xff]
    %v117 = vld [vmem:[#allocation7 + $0x178] sm:$0xff]
    %v118 = vld [vmem:[#allocation7 + $0x180] sm:$0xff]
    %v119 = vld [vmem:[#allocation7 + $0x188] sm:$0xff]
    %v120 = vld [vmem:[#allocation7 + $0x190] sm:$0xff]
    %v121 = vld [vmem:[#allocation7 + $0x198] sm:$0xff]
    %v122 = vld [vmem:[#allocation7 + $0x1a0] sm:$0xff]
    %v123 = vld [vmem:[#allocation7 + $0x1a8] sm:$0xff]
    %v124 = vld [vmem:[#allocation7 + $0x1b0] sm:$0xff]
    %v125 = vld [vmem:[#allocation7 + $0x1b8] sm:$0xff]
    %v126 = vld [vmem:[#allocation7 + $0x1c0] sm:$0xff]
    %v127 = vld [vmem:[#allocation7 + $0x1c8] sm:$0xff]
    %v128 = vld [vmem:[#allocation7 + $0x1d0] sm:$0xff]
    %v129 = vld [vmem:[#allocation7 + $0x1d8] sm:$0xff]
    %v130 = vld [vmem:[#allocation7 + $0x1e0] sm:$0xff]
    %v131 = vld [vmem:[#allocation7 + $0x1e8] sm:$0xff]
    %v132 = vld [vmem:[#allocation7 + $0x1f0] sm:$0xff]
    %v133 = vld [vmem:[#allocation7 + $0x1f8] sm:$0xff]
    %v134 = vld [vmem:[#allocation7 + $0x200] sm:$0xff]
    %v135 = vld [vmem:[#allocation7 + $0x208] sm:$0xff]
    %v136 = vld [vmem:[#allocation7 + $0x210] sm:$0xff]
    %v137 = vld [vmem:[#allocation7 + $0x218] sm:$0xff]
    %v138 = vld [vmem:[#allocation7 + $0x220] sm:$0xff]
    %v139 = vld [vmem:[#allocation7 + $0x228] sm:$0xff]
    %v140 = vld [vmem:[#allocation7 + $0x230] sm:$0xff]
    %v141 = vld [vmem:[#allocation7 + $0x238] sm:$0xff]
    %v142 = vld [vmem:[#allocation7 + $0x240] sm:$0xff]
    %v143 = vld [vmem:[#allocation7 + $0x248] sm:$0xff]
    %v144 = vld [vmem:[#allocation7 + $0x250] sm:$0xff]
    %v145 = vld [vmem:[#allocation7 + $0x258] sm:$0xff]
    %v146 = vld [vmem:[#allocation7 + $0x260] sm:$0xff]
    %v147 = vld [vmem:[#allocation7 + $0x268] sm:$0xff]
    %v148 = vld [vmem:[#allocation7 + $0x270] sm:$0xff]
    %v149 = vld [vmem:[#allocation7 + $0x278] sm:$0xff]
    %v150 = vld [vmem:[#allocation7 + $0x280] sm:$0xff]
    %v151 = vperm.slane %v150, 0
    %152 = vmatpush.msra.mxu0 %v85
    %153 = vmatpush.msra.mxu0 %v84
    %154 = vmatpush.msra.mxu0 %v83
    %155 = vmatpush.msra.mxu0 %v82
    %156 = vmatpush.msra.mxu0 %v81
    %157 = vmatpush.msra.mxu0 %v80
    %158 = vmatpush.msra.mxu0 %v79
    %159 = vmatpush.msra.mxu0 %v78
    %160 = vmatpush.msra.mxu0 %v77
    %161 = vmatpush.msra.mxu0 %v76
    %162 = vmatpush.msra.mxu0 %v75
    %163 = vmatpush.msra.mxu0 %v74
    %164 = vmatpush.msra.mxu0 %v73
    %165 = vmatpush.msra.mxu0 %v72
    %166 = vmatpush.msra.mxu0 %v71
    %167 = vmatpush.msra.mxu0 %v70
    %168 = vmatmul.f32.gmra.mxu0 %v60
    %v169 = vpop.f32.mrf.mxu0
    %v170 = vadd.f32 %v151, %v169
    %171 = vmatmul.f32.gmra.mxu0 %v61
    %v172 = vpop.f32.mrf.mxu0
    %v173 = vadd.f32 %v151, %v172
    %174 = vmatmul.f32.gmra.mxu0 %v62
    %v175 = vpop.f32.mrf.mxu0
    %v176 = vadd.f32 %v151, %v175
    %177 = vmatmul.f32.gmra.mxu0 %v63
    %v178 = vpop.f32.mrf.mxu0
    %v179 = vadd.f32 %v151, %v178
    %180 = vmatmul.f32.gmra.mxu0 %v64
    %v181 = vpop.f32.mrf.mxu0
    %v182 = vadd.f32 %v151, %v181
    %183 = vmatmul.f32.gmra.mxu0 %v65
    %v184 = vpop.f32.mrf.mxu0
    %v185 = vadd.f32 %v151, %v184
    %186 = vmatmul.f32.gmra.mxu0 %v66
    %v187 = vpop.f32.mrf.mxu0
    %v188 = vadd.f32 %v151, %v187
    %189 = vmatmul.f32.gmra.mxu0 %v67
    %v190 = vpop.f32.mrf.mxu0
    %v191 = vadd.f32 %v151, %v190
    %192 = vmatmul.f32.gmra.mxu0 %v68
    %v193 = vpop.f32.mrf.mxu0
    %v194 = vadd.f32 %v151, %v193
    %195 = vmatmul.f32.gmra.mxu0 %v69
    %v196 = vpop.f32.mrf.mxu0
    %v197 = vadd.f32 %v151, %v196
    %198 = vdwg.mxu0
    %v199 = vmax.f32 %v170, 0.0
    %v200 = vmax.f32 %v173, 0.0
    %v201 = vmax.f32 %v176, 0.0
    %v202 = vmax.f32 %v179, 0.0
    %v203 = vmax.f32 %v182, 0.0
    %v204 = vmax.f32 %v185, 0.0
    %v205 = vmax.f32 %v188, 0.0
    %v206 = vmax.f32 %v191, 0.0
    %v207 = vmax.f32 %v194, 0.0
    %v208 = vmax.f32 %v197, 0.0
    %v209 = vperm.slane %v150, 1
    %210 = vmatpush.msra.mxu0 %v101
    %211 = vmatpush.msra.mxu0 %v100
    %212 = vmatpush.msra.mxu0 %v99
    %213 = vmatpush.msra.mxu0 %v98
    %214 = vmatpush.msra.mxu0 %v97
    %215 = vmatpush.msra.mxu0 %v96
    %216 = vmatpush.msra.mxu0 %v95
    %217 = vmatpush.msra.mxu0 %v94
    %218 = vmatpush.msra.mxu0 %v93
    %219 = vmatpush.msra.mxu0 %v92
    %220 = vmatpush.msra.mxu0 %v91
    %221 = vmatpush.msra.mxu0 %v90
    %222 = vmatpush.msra.mxu0 %v89
    %223 = vmatpush.msra.mxu0 %v88
    %224 = vmatpush.msra.mxu0 %v87
    %225 = vmatpush.msra.mxu0 %v86
    %226 = vmatmul.f32.gmra.mxu0 %v199
    %v227 = vpop.f32.mrf.mxu0
    %v228 = vadd.f32 %v209, %v227
    %229 = vmatmul.f32.gmra.mxu0 %v200
    %v230 = vpop.f32.mrf.mxu0
    %v231 = vadd.f32 %v209, %v230
    %232 = vmatmul.f32.gmra.mxu0 %v201
    %v233 = vpop.f32.mrf.mxu0
    %v234 = vadd.f32 %v209, %v233
    %235 = vmatmul.f32.gmra.mxu0 %v202
    %v236 = vpop.f32.mrf.mxu0
    %v237 = vadd.f32 %v209, %v236
    %238 = vmatmul.f32.gmra.mxu0 %v203
    %v239 = vpop.f32.mrf.mxu0
    %v240 = vadd.f32 %v209, %v239
    %241 = vmatmul.f32.gmra.mxu0 %v204
    %v242 = vpop.f32.mrf.mxu0
    %v243 = vadd.f32 %v209, %v242
    %244 = vmatmul.f32.gmra.mxu0 %v205
    %v245 = vpop.f32.mrf.mxu0
    %v246 = vadd.f32 %v209, %v245
    %247 = vmatmul.f32.gmra.mxu0 %v206
    %v248 = vpop.f32.mrf.mxu0
    %v249 = vadd.f32 %v209, %v248
    %250 = vmatmul.f32.gmra.mxu0 %v207
    %v251 = vpop.f32.mrf.mxu0
    %v252 = vadd.f32 %v209, %v251
    %253 = vmatmul.f32.gmra.mxu0 %v208
    %v254 = vpop.f32.mrf.mxu0
    %v255 = vadd.f32 %v209, %v254
    %256 = vdwg.mxu0
    %v257 = vmax.f32 %v228, 0.0
    %v258 = vmax.f32 %v231, 0.0
    %v259 = vmax.f32 %v234, 0.0
    %v260 = vmax.f32 %v237, 0.0
    %v261 = vmax.f32 %v240, 0.0
    %v262 = vmax.f32 %v243, 0.0
    %v263 = vmax.f32 %v246, 0.0
    %v264 = vmax.f32 %v249, 0.0
    %v265 = vmax.f32 %v252, 0.0
    %v266 = vmax.f32 %v255, 0.0
    %v267 = vmax.f32 %v257, %v258
    %v268 = vmax.f32 %v267, %v259
    %v269 = vmax.f32 %v268, %v260
    %v270 = vmax.f32 %v269, %v261
    %v271 = vmax.f32 %v270, %v262
    %v272 = vmax.f32 %v271, %v263
    %v273 = vmax.f32 %v272, %v264
    %v274 = vmax.f32 %v273, %v265
    %v275 = vmax.f32 %v274, %v266
    %v276 = vld [vmem:[#allocation5] sm:$0xff]
    %v277 = vadd.f32 %v275, %v276
    %v278 = vperm.slane %v150, 2
    %279 = vmatpush.msra.mxu0 %v117
    %280 = vmatpush.msra.mxu0 %v116
    %281 = vmatpush.msra.mxu0 %v115
    %282 = vmatpush.msra.mxu0 %v114
    %283 = vmatpush.msra.mxu0 %v113
    %284 = vmatpush.msra.mxu0 %v112
    %285 = vmatpush.msra.mxu0 %v111
    %286 = vmatpush.msra.mxu0 %v110
    %287 = vmatpush.msra.mxu0 %v109
    %288 = vmatpush.msra.mxu0 %v108
    %289 = vmatpush.msra.mxu0 %v107
    %290 = vmatpush.msra.mxu0 %v106
    %291 = vmatpush.msra.mxu0 %v105
    %292 = vmatpush.msra.mxu0 %v104
    %293 = vmatpush.msra.mxu0 %v103
    %294 = vmatpush.msra.mxu0 %v102
    %295 = vmatmul.f32.gmra.mxu0 %v277
    %v296 = vpop.f32.mrf.mxu0
    %v297 = vadd.f32 %v278, %v296
    %298 = vdwg.mxu0
    %v299 = vmax.f32 %v297, 0.0
    %v300 = vperm.slane %v150, 3
    %301 = vmatpush.msra.mxu0 %v133
    %302 = vmatpush.msra.mxu0 %v132
    %303 = vmatpush.msra.mxu0 %v131
    %304 = vmatpush.msra.mxu0 %v130
    %305 = vmatpush.msra.mxu0 %v129
    %306 = vmatpush.msra.mxu0 %v128
    %307 = vmatpush.msra.mxu0 %v127
    %308 = vmatpush.msra.mxu0 %v126
    %309 = vmatpush.msra.mxu0 %v125
    %310 = vmatpush.msra.mxu0 %v124
    %311 = vmatpush.msra.mxu0 %v123
    %312 = vmatpush.msra.mxu0 %v122
    %313 = vmatpush.msra.mxu0 %v121
    %314 = vmatpush.msra.mxu0 %v120
    %315 = vmatpush.msra.mxu0 %v119
    %316 = vmatpush.msra.mxu0 %v118
    %317 = vmatmul.f32.gmra.mxu0 %v299
    %v318 = vpop.f32.mrf.mxu0
    %v319 = vadd.f32 %v300, %v318
    %320 = vdwg.mxu0
    %v321 = vmax.f32 %v319, 0.0
    %v322 = vperm.slane %v150, 4
    %323 = vmatpush.msra.mxu0 %v149
    %324 = vmatpush.msra.mxu0 %v148
    %325 = vmatpush.msra.mxu0 %v147
    %326 = vmatpush.msra.mxu0 %v146
    %327 = vmatpush.msra.mxu0 %v145
    %328 = vmatpush.msra.mxu0 %v144
    %329 = vmatpush.msra.mxu0 %v143
    %330 = vmatpush.msra.mxu0 %v142
    %331 = vmatpush.msra.mxu0 %v141
    %332 = vmatpush.msra.mxu0 %v140
    %333 = vmatpush.msra.mxu0 %v139
    %334 = vmatpush.msra.mxu0 %v138
    %335 = vmatpush.msra.mxu0 %v137
    %336 = vmatpush.msra.mxu0 %v136
    %337 = vmatpush.msra.mxu0 %v135
    %338 = vmatpush.msra.mxu0 %v134
    %339 = vmatmul.f32.gmra.mxu0 %v321
    %v340 = vpop.f32.mrf.mxu0
    %v341 = vadd.f32 %v322, %v340
    %342 = vdwg.mxu0
    %343 = vst [vmem:[#allocation8] sm:$0xff] %v341
    // Predicated region
    $region26: #{tpu_custom_call.1} parent=1 // pred_check
      _
    $region27: #{tpu_custom_call.1} parent=1 // pred_check_branch
      %345 = sbr.rel (0) target = $region29
    $region28: #{tpu_custom_call.1} parent=1 // pred_region
      %347 = vsyncadd [#allocation4], 0
      %s349 = sshll.u32 [#allocation8], 4
      %s350 = int_to_ptr.vmem [resolvable:$true] %s349
      %s351 = sshll.u32 %s3, 4
      %s352 = int_to_ptr.hbm [resolvable:$true] %s351
      %354 = dma.vmem_to_hbm [thread:$0]  %s350, 128, %s352, [#allocation4]
    $region29: #{tpu_custom_call.1} parent=1 // pred_fallthru
      _
    // Predicated region
    $region30: #{tpu_custom_call.1} parent=1 // pred_check
      _
    $region31: #{tpu_custom_call.1} parent=1 // pred_check_branch
      %356 = sbr.rel (0) target = $region33
    $region32: #{tpu_custom_call.1} parent=1 // pred_region
      %358 = dma.done [#allocation4], 128
    $region33: #{tpu_custom_call.1} parent=1 // pred_fallthru
      _
    %359 = vsyncpa [#allocation3], 1
    %360 = vsyncpa [#allocation6], 1
    %361 = vsyncpa [#allocation4], 1

</llo_original>
